<compile_context>
chip_gen: v6e
topology: v6e:2x2x1
jax: 0.10.0
libtpu: 0.0.40
codegen_flags: <defaults>
</compile_context>

<pallas_src>
import functools

import jax
import jax.numpy as jnp
from jax.experimental import pallas as pl
from jax.experimental.pallas import tpu as pltpu


# ----------------------------------------------------------------------------
# Tiling helper
# ----------------------------------------------------------------------------
def _pick_time_tile(T, D, itemsize, target_bytes=1 << 20):
    """Pick a time tile so each (1, tT, D) block is ~1 MiB (measured sweet spot
    for mem-bound elementwise kernels) while 3 big operands x 2 pipeline
    buffers stay well under the scoped-VMEM default on every generation
    (16 MiB on v5e, 32 MiB on v6e/v7x; v7x physical VMEM is only 64 MiB).

    Sub-T tiles must be a multiple of 8 (sublane axis); a full-T tile is
    always legal regardless of alignment.
    """
    row_bytes = max(1, int(D) * int(itemsize))
    tT = target_bytes // row_bytes
    if tT >= T:
        return T
    return max(8, (tT // 8) * 8) if T > 8 else T


# ----------------------------------------------------------------------------
# Pallas kernels
# ----------------------------------------------------------------------------
def _fuse_sum_kernel(x_ref, cond_ref, mask_ref, o_ref):
    """Single aligned full-block FMA.

    cond/mask were zero-padded with one leading time-step in the wrapper, so
    there are no split sub-tile writes crossing the (8, 128) tile boundary.
    Math is done in float32 (v5e VPU has no native bf16) and cast on store.
    mask arrives as (1, tT, 1): broadcasting along D is a cheap lane
    broadcast, no lane->sublane relayout.
    """
    x = x_ref[...].astype(jnp.float32)
    cond = cond_ref[...].astype(jnp.float32)
    mask = mask_ref[...].astype(jnp.float32)
    o_ref[...] = (x + cond * mask).astype(o_ref.dtype)


def _add_posemb_kernel(c_ref, emb_ref, o_ref, *, scale):
    """cross + scale * (precomputed) sinusoidal positional embedding."""
    c = c_ref[...].astype(jnp.float32)
    e = emb_ref[...].astype(jnp.float32)
    o_ref[...] = (c + jnp.float32(scale) * e).astype(o_ref.dtype)


# ----------------------------------------------------------------------------
# Pallas wrappers
# ----------------------------------------------------------------------------
def fuse_sum(x, cond, mask):
    """out[:, 0] = x[:, 0]; out[:, 1:] = x[:, 1:] + cond * mask[..., None].

    The output aliases x's buffer (x is dead after fusion in the module), so
    no extra HBM allocation/write of the unchanged data path is needed when
    the caller donates x (e.g. under jit); otherwise XLA inserts a copy and
    correctness is unaffected.
    """
    B, T, D = x.shape
    assert cond.shape == (B, T - 1, D) and mask.shape == (B, T - 1)
    if mask.dtype == jnp.bool_:
        mask = mask.astype(jnp.float32)
    # Leading zero time-step -> kernel is one aligned full-block FMA.
    cond_p = jnp.pad(cond, ((0, 0), (1, 0), (0, 0)))
    mask_p = jnp.pad(mask[..., None], ((0, 0), (1, 0), (0, 0)))

    tT = _pick_time_tile(T, D, x.dtype.itemsize)
    grid = (B, pl.cdiv(T, tT))
    return pl.pallas_call(
        _fuse_sum_kernel,
        out_shape=jax.ShapeDtypeStruct((B, T, D), x.dtype),
        grid=grid,
        in_specs=[
            pl.BlockSpec((1, tT, D), lambda b, t: (b, t, 0)),
            pl.BlockSpec((1, tT, D), lambda b, t: (b, t, 0)),
            pl.BlockSpec((1, tT, 1), lambda b, t: (b, t, 0)),
        ],
        out_specs=pl.BlockSpec((1, tT, D), lambda b, t: (b, t, 0)),
        input_output_aliases={0: 0},
        compiler_params=pltpu.CompilerParams(
            dimension_semantics=("parallel", "parallel")),
    )(x, cond_p, mask_p)


def _sin_embedding(S, D, max_period=10000.0):
    """Matches ConditionFuserStreamer.create_sin_embedding (float32).
    Note: like the PyTorch reference, D == 2 would divide by (half - 1) == 0."""
    half = D // 2
    pos = jnp.arange(S, dtype=jnp.float32)[:, None]
    adim = jnp.arange(half, dtype=jnp.float32)[None, :]
    phase = pos / (jnp.float32(max_period) ** (adim / (half - 1)))
    return jnp.concatenate([jnp.cos(phase), jnp.sin(phase)], axis=-1)


def add_cross_pos_emb(cross, scale, max_period=10000.0):
    """cross + scale * sinusoidal positional embedding (tiled VPU add)."""
    B, S, D = cross.shape
    assert D % 2 == 0
    # Hoist the embedding out of the kernel: computed once here, its BlockSpec
    # re-reads the same time block for every batch tile.
    emb = _sin_embedding(S, D, max_period)[None]  # (1, S, D) float32

    tS = _pick_time_tile(S, D, max(cross.dtype.itemsize, 4))
    grid = (B, pl.cdiv(S, tS))
    kern = functools.partial(_add_posemb_kernel, scale=float(scale))
    return pl.pallas_call(
        kern,
        out_shape=jax.ShapeDtypeStruct((B, S, D), cross.dtype),
        grid=grid,
        in_specs=[
            pl.BlockSpec((1, tS, D), lambda b, s: (b, s, 0)),
            pl.BlockSpec((1, tS, D), lambda b, s: (0, s, 0)),
        ],
        out_specs=pl.BlockSpec((1, tS, D), lambda b, s: (b, s, 0)),
        compiler_params=pltpu.CompilerParams(
            dimension_semantics=("parallel", "parallel")),
    )(cross, emb)


# ----------------------------------------------------------------------------
# Module equivalent
# ----------------------------------------------------------------------------
class ConditionFuserStreamerPallas:
    FUSING_METHODS = ['sum', 'prepend', 'cross', 'input_interpolate', 'cross_seperate']

    def __init__(self, fuse2cond, cross_attention_pos_emb=False,
                 cross_attention_pos_emb_scale=1.0):
        assert all(k in self.FUSING_METHODS for k in fuse2cond.keys()), (
            f'Got invalid fuse method, allowed methods: {self.FUSING_METHODS}')
        self.cross_attention_pos_emb = cross_attention_pos_emb
        self.cross_attention_pos_emb_scale = cross_attention_pos_emb_scale
        self.fuse2cond = fuse2cond
        self.cond2fuse = {}
        for fuse_method, conds in fuse2cond.items():
            for c in conds:
                self.cond2fuse[c] = fuse_method

    def __call__(self, input_, conditions):
        input, input_padding_mask = input_
        assert set(conditions.keys()).issubset(set(self.cond2fuse.keys())), (
            f'unknown conditions for fuser: {conditions.keys()}')
        cross_attention_output = None
        cross_attention_mask = None

        for cond_type, (cond, cond_mask) in conditions.items():
            op = self.cond2fuse[cond_type]
            if op == 'sum':
                input = fuse_sum(input, cond, cond_mask)
            elif op == 'prepend':
                # TODO(synk): when a 'sum' directly precedes the 'prepend', fuse
                # this concat into the sum kernel's output (offset output block)
                # to save one full HBM round-trip of `input`; kept as XLA concat
                # to preserve the dict-order semantics in the general case.
                if cond.ndim == 2:
                    cond = cond[:, None, :]
                input = jnp.concatenate([cond, input], axis=1)
                input_padding_mask = jnp.concatenate(
                    [jnp.ones_like(cond_mask, dtype=jnp.bool_), input_padding_mask],
                    axis=1)
            elif op == 'cross':
                if cross_attention_output is not None:
                    cross_attention_output = jnp.concatenate(
                        [cross_attention_output, cond], axis=1)
                    cross_attention_mask = jnp.concatenate(
                        [cross_attention_mask, cond_mask], axis=1)
                else:
                    cross_attention_output = cond
                    cross_attention_mask = cond_mask
            elif op == 'cross_seperate':
                if cross_attention_output is not None:
                    cross_attention_output[cond_type] = cond
                    cross_attention_mask[cond_type] = cond_mask
                else:
                    cross_attention_output = {cond_type: cond}
                    cross_attention_mask = {cond_type: cond_mask}
            elif op == 'input_interpolate':
                # TODO(synk): nearest-neighbor time interpolation (F.interpolate)
                # not exercised here; a gather + fuse_sum kernel would cover it.
                raise NotImplementedError('input_interpolate not implemented')
            else:
                raise ValueError(f'unknown op ({op})')

        if self.cross_attention_pos_emb and cross_attention_output is not None:
            if isinstance(cross_attention_output, dict):
                cross_attention_output = {
                    k: add_cross_pos_emb(v, self.cross_attention_pos_emb_scale)
                    for k, v in cross_attention_output.items()}
            else:
                cross_attention_output = add_cross_pos_emb(
                    cross_attention_output, self.cross_attention_pos_emb_scale)

        return ((input, input_padding_mask),
                (cross_attention_output, cross_attention_mask))


# ----------------------------------------------------------------------------
# Demo / correctness check
# ----------------------------------------------------------------------------
if __name__ == "__main__":
    key = jax.random.PRNGKey(0)
    B, T, D = 2, 8, 32
    S_audio = 6

    k = jax.random.split(key, 6)
    x = jax.random.normal(k[0], (B, T, D), dtype=jnp.float32)
    x_mask = jnp.ones((B, T), dtype=jnp.bool_)

    bpm_cond = jax.random.normal(k[1], (B, T - 1, D), dtype=jnp.float32)
    bpm_mask = (jax.random.uniform(k[2], (B, T - 1)) > 0.3).astype(jnp.float32)

    text_cond = jax.random.normal(k[3], (B, 1, D), dtype=jnp.float32)
    text_mask = jnp.ones((B, 1), dtype=jnp.float32)

    audio_cond = jax.random.normal(k[4], (B, S_audio, D), dtype=jnp.float32)
    audio_mask = (jax.random.uniform(k[5], (B, S_audio)) > 0.2).astype(jnp.float32)

    # Pure-JAX reference computed BEFORE the fuser call: fuse_sum aliases the
    # input buffer, so do not rely on `x` being live afterwards.
    ref_x = x.at[:, 1:].add(bpm_cond * bpm_mask[..., None])
    ref_x = jnp.concatenate([text_cond, ref_x], axis=1)
    ref_mask = jnp.concatenate([jnp.ones((B, 1), dtype=jnp.bool_), x_mask], axis=1)
    ref_cross = audio_cond + 1.0 * _sin_embedding(S_audio, D)[None]
    jax.block_until_ready((ref_x, ref_mask, ref_cross))

    fuser = ConditionFuserStreamerPallas(
        fuse2cond={"prepend": ["text"], "sum": ["bpm"], "cross": ["audio"]},
        cross_attention_pos_emb=True,
        cross_attention_pos_emb_scale=1.0,
    )

    conditions = {
        "bpm": (bpm_cond, bpm_mask),        # sum      (dict order -> applied first)
        "text": (text_cond, text_mask),     # prepend
        "audio": (audio_cond, audio_mask),  # cross
    }

    (out_x, out_mask), (cross_out, cross_mask) = fuser((x, x_mask), conditions)
    jax.block_until_ready((out_x, out_mask, cross_out, cross_mask))

    assert out_x.shape == (B, T + 1, D) and out_mask.shape == (B, T + 1)
    assert jnp.allclose(out_x, ref_x, atol=1e-5)
    assert jnp.array_equal(out_mask, ref_mask)
    assert jnp.allclose(cross_out, ref_cross, atol=1e-4)
    assert jnp.allclose(cross_mask, audio_mask)

    print("KERNEL_OK")
</pallas_src>

<mosaic_0001>
module attributes {stable_mosaic.version = 11 : i64} {
  func.func @_fuse_sum_kernel(%arg0: i32, %arg1: i32, %arg2: memref<1x8x32xf32, #tpu.memory_space<vmem>>, %arg3: memref<1x8x32xf32, #tpu.memory_space<vmem>>, %arg4: memref<1x8x1xf32, #tpu.memory_space<vmem>>, %arg5: memref<1x8x32xf32, #tpu.memory_space<vmem>>) attributes {dimension_semantics = [#tpu.dimension_semantics<parallel>, #tpu.dimension_semantics<parallel>], iteration_bounds = array<i64: 2, 1>, scalar_prefetch = 0 : i64, scratch_operands = 0 : i64, tpu.core_type = #tpu.core_type<tc>, window_params = [{transform_indices = @transform_0, window_bounds = array<i64: 1, 8, 32>}, {transform_indices = @transform_1, window_bounds = array<i64: 1, 8, 32>}, {transform_indices = @transform_2, window_bounds = array<i64: 1, 8, 1>}, {transform_indices = @transform_3, window_bounds = array<i64: 1, 8, 32>}]} {
    %c0 = arith.constant 0 : index
    %c0_0 = arith.constant 0 : index
    %c0_1 = arith.constant 0 : index
    %0 = vector.load %arg2[%c0, %c0_0, %c0_1] : memref<1x8x32xf32, #tpu.memory_space<vmem>>, vector<1x8x32xf32>
    %c0_2 = arith.constant 0 : index
    %c0_3 = arith.constant 0 : index
    %c0_4 = arith.constant 0 : index
    %1 = vector.load %arg3[%c0_2, %c0_3, %c0_4] : memref<1x8x32xf32, #tpu.memory_space<vmem>>, vector<1x8x32xf32>
    %c0_5 = arith.constant 0 : index
    %c0_6 = arith.constant 0 : index
    %c0_7 = arith.constant 0 : index
    %2 = vector.load %arg4[%c0_5, %c0_6, %c0_7] : memref<1x8x1xf32, #tpu.memory_space<vmem>>, vector<1x8x1xf32>
    %3 = vector.broadcast %2 : vector<1x8x1xf32> to vector<1x8x32xf32>
    %4 = arith.mulf %1, %3 : vector<1x8x32xf32>
    %5 = arith.addf %0, %4 : vector<1x8x32xf32>
    %c0_8 = arith.constant 0 : index
    %c0_9 = arith.constant 0 : index
    %c0_10 = arith.constant 0 : index
    %6 = vector.load %arg5[%c0_8, %c0_9, %c0_10] : memref<1x8x32xf32, #tpu.memory_space<vmem>>, vector<1x8x32xf32>
    tpu.vector_store %arg5[%c0_8, %c0_9, %c0_10], %5 {strides = array<i32>} : memref<1x8x32xf32, #tpu.memory_space<vmem>>, vector<1x8x32xf32>,
    return
  }
  func.func @transform_0(%arg0: i32, %arg1: i32) -> (i32, i32, i32) {
    %c0_i32 = arith.constant 0 : i32
    %c0_i32_0 = arith.constant 0 : i32
    return %arg0, %arg1, %c0_i32 : i32, i32, i32
  }
  func.func @transform_1(%arg0: i32, %arg1: i32) -> (i32, i32, i32) {
    %c0_i32 = arith.constant 0 : i32
    %c0_i32_0 = arith.constant 0 : i32
    return %arg0, %arg1, %c0_i32 : i32, i32, i32
  }
  func.func @transform_2(%arg0: i32, %arg1: i32) -> (i32, i32, i32) {
    %c0_i32 = arith.constant 0 : i32
    %c0_i32_0 = arith.constant 0 : i32
    return %arg0, %arg1, %c0_i32 : i32, i32, i32
  }
  func.func @transform_3(%arg0: i32, %arg1: i32) -> (i32, i32, i32) {
    %c0_i32 = arith.constant 0 : i32
    %c0_i32_0 = arith.constant 0 : i32
    return %arg0, %arg1, %c0_i32 : i32, i32, i32
  }
}

</mosaic_0001>

<llo_original>
// kernel: tpu_custom_call.1
$region0: #{tpu_custom_call.1}
  #allocation0 [shape = 'u32[]', space=smem, size = 0x4, offset = 0x4, fixed_abs, tag = 'smem constant byte address 0x4 - core index']
  #allocation1 [shape = 'u32[144,128]{1,0:T(1,128)}', space=vmem, size = 0x12000, scoped, tag = 'internal scratch']
  %s0 = inlined_call_operand.hbm [shape: f32[2,8,32], index: 0, kind: input, shape index: {}, may-alias: {0,3}]
  %s1 = inlined_call_operand.vmem [shape: f32[2,8,32], index: 1, kind: input, shape index: {}]
  %s2 = inlined_call_operand.vmem [shape: f32[2,8,1], index: 2, kind: input, shape index: {}]
  %s3 = inlined_call_operand.hbm [shape: f32[2,8,32], index: 3, kind: output, shape index: {}, may-alias: {0,3}]
  %s4 = sld [smem:[#allocation0]]
  $region49: #{tpu_custom_call.1} parent=0
    _
  %s6 = ssub.s32 1, %s4
  %s7 = scalar_select 0, %s6, %s4
  $region1: #{tpu_custom_call.1} parent=0
    #allocation2 [shape = 'u8[8192]{0}', space=vmem, size = 0x2000, scoped, tag = 'input window, operand 0']
    #allocation3 [shape = 's32[2]{0}', space=sflag, size = 0x8, scoped, tag = 'scoped memory for tpu_custom_call.1']
    #allocation4 [shape = 's32[2]{0}', space=sflag, size = 0x8, scoped, tag = 'scoped memory for tpu_custom_call.1']
    #allocation5 [shape = 'u8[8192]{0}', space=vmem, size = 0x2000, scoped, tag = 'output window, operand 0']
    %8 = vsyncpa [#allocation3], 0
    %s9 = scalar_lea.sflag [#allocation3], 1
    %10 = vsyncpa %s9, 0
    %11 = vsyncpa [#allocation4], 0
    %s12 = scalar_lea.sflag [#allocation4], 1
    %13 = vsyncpa %s12, 0
    loop: start=0, step=1, limit=4
    $region2: #{tpu_custom_call.1} parent=1 // loop_pre_header
      _
    $region3: #{tpu_custom_call.1} parent=1 // loop_header
      %s15 = sphi 0, %s19
      %p16 = scmp.ge.s32.totalorder %s15, 4
      %s22 = sphi 0, %s34
      %s23 = sphi 0, %s30
      %s24 = sphi 0, %s22
      %s25 = sphi 0, %s23
      %s26 = sphi 0, %s24
      %s27 = sphi 0, %s25
      %s39 = sphi 0, %s41
      %s42 = sphi 0, %s39
      %s43 = sphi 0, %s42
      %s59 = sphi 0, %s43
      %s67 = sphi 0, %s69
      %s70 = sphi 0, %s67
      %s71 = sphi 0, %s70
      %s87 = sphi 0, %s71
      %s95 = sphi 0, %s97
      %s98 = sphi 0, %s95
      %s99 = sphi 0, %s98
      %s115 = sphi 0, %s99
      %s123 = sphi 0, %s125
      %s126 = sphi 0, %s123
      %s127 = sphi 0, %s126
      %s143 = sphi 0, %s127
    $region4: #{tpu_custom_call.1} parent=1 // loop_header_branch
      %18 = sbr.rel (%p16) target = $region8
    $region5: #{tpu_custom_call.1} parent=1 // loop_body
      %s20 = ssub.s32 %s15, 1
      %s21 = ssub.s32 %s15, 2
      %s28 = sadd.s32 1, %s23
      %p29 = scmp.ge.s32.totalorder %s28, 1
      %s30 = scalar_select %p29, 0, %s28
      %s31 = sadd.s32 1, %s22
      %s32 = scalar_select %p29, %s31, %s22
      %p33 = scmp.ge.s32.totalorder %s32, 2
      %s34 = scalar_select %p33, 0, %s32
      %s35 = ssub.s32 %s22, %s34
      %s36 = ssub.s32 %s23, %s30
      %s37 = sor.u32 %s35, %s36
      %p38 = scmp.eq.s32.totalorder %s37, 0
      %s40 = sadd.s32 %s39, 1
      %s41 = scalar_select %p38, %s39, %s40
      %p44 = pneg %p38
      %p45 = scmp.eq.s32.totalorder %s15, 1
      %p46 = por %p44, %p45
      %p47 = scmp.ne.s32.totalorder %s39, %s42
      %p48 = scmp.eq.s32.totalorder %s15, 0
      %p49 = por %p47, %p48
      %p50 = scmp.ne.s32.totalorder %s39, %s42
      %p51 = scmp.eq.s32.totalorder %s20, 1
      %p52 = por %p50, %p51
      %p53 = scmp.ne.s32.totalorder %s42, %s43
      %p54 = scmp.eq.s32.totalorder %s20, 0
      %p55 = por %p53, %p54
      %p56 = scmp.ne.s32.totalorder %s42, %s43
      %p57 = scmp.eq.s32.totalorder %s21, 1
      %p58 = por %p56, %p57
      %p60 = scmp.ne.s32.totalorder %s43, %s59
      %p61 = scmp.eq.s32.totalorder %s21, 0
      %p62 = por %p60, %p61
      %s63 = ssub.s32 %s22, %s34
      %s64 = ssub.s32 %s23, %s30
      %s65 = sor.u32 %s63, %s64
      %p66 = scmp.eq.s32.totalorder %s65, 0
      %s68 = sadd.s32 %s67, 1
      %s69 = scalar_select %p66, %s67, %s68
      %p72 = pneg %p66
      %p73 = scmp.eq.s32.totalorder %s15, 1
      %p74 = por %p72, %p73
      %p75 = scmp.ne.s32.totalorder %s67, %s70
      %p76 = scmp.eq.s32.totalorder %s15, 0
      %p77 = por %p75, %p76
      %p78 = scmp.ne.s32.totalorder %s67, %s70
      %p79 = scmp.eq.s32.totalorder %s20, 1
      %p80 = por %p78, %p79
      %p81 = scmp.ne.s32.totalorder %s70, %s71
      %p82 = scmp.eq.s32.totalorder %s20, 0
      %p83 = por %p81, %p82
      %p84 = scmp.ne.s32.totalorder %s70, %s71
      %p85 = scmp.eq.s32.totalorder %s21, 1
      %p86 = por %p84, %p85
      %p88 = scmp.ne.s32.totalorder %s71, %s87
      %p89 = scmp.eq.s32.totalorder %s21, 0
      %p90 = por %p88, %p89
      %s91 = ssub.s32 %s22, %s34
      %s92 = ssub.s32 %s23, %s30
      %s93 = sor.u32 %s91, %s92
      %p94 = scmp.eq.s32.totalorder %s93, 0
      %s96 = sadd.s32 %s95, 1
      %s97 = scalar_select %p94, %s95, %s96
      %p100 = pneg %p94
      %p101 = scmp.eq.s32.totalorder %s15, 1
      %p102 = por %p100, %p101
      %p103 = scmp.ne.s32.totalorder %s95, %s98
      %p104 = scmp.eq.s32.totalorder %s15, 0
      %p105 = por %p103, %p104
      %p106 = scmp.ne.s32.totalorder %s95, %s98
      %p107 = scmp.eq.s32.totalorder %s20, 1
      %p108 = por %p106, %p107
      %p109 = scmp.ne.s32.totalorder %s98, %s99
      %p110 = scmp.eq.s32.totalorder %s20, 0
      %p111 = por %p109, %p110
      %p112 = scmp.ne.s32.totalorder %s98, %s99
      %p113 = scmp.eq.s32.totalorder %s21, 1
      %p114 = por %p112, %p113
      %p116 = scmp.ne.s32.totalorder %s99, %s115
      %p117 = scmp.eq.s32.totalorder %s21, 0
      %p118 = por %p116, %p117
      %s119 = ssub.s32 %s22, %s34
      %s120 = ssub.s32 %s23, %s30
      %s121 = sor.u32 %s119, %s120
      %p122 = scmp.eq.s32.totalorder %s121, 0
      %s124 = sadd.s32 %s123, 1
      %s125 = scalar_select %p122, %s123, %s124
      %p128 = pneg %p122
      %p129 = scmp.eq.s32.totalorder %s15, 1
      %p130 = por %p128, %p129
      %p131 = scmp.ne.s32.totalorder %s123, %s126
      %p132 = scmp.eq.s32.totalorder %s15, 0
      %p133 = por %p131, %p132
      %p134 = scmp.ne.s32.totalorder %s123, %s126
      %p135 = scmp.eq.s32.totalorder %s20, 1
      %p136 = por %p134, %p135
      %p137 = scmp.ne.s32.totalorder %s126, %s127
      %p138 = scmp.eq.s32.totalorder %s20, 0
      %p139 = por %p137, %p138
      %p140 = scmp.ne.s32.totalorder %s126, %s127
      %p141 = scmp.eq.s32.totalorder %s21, 1
      %p142 = por %p140, %p141
      %p144 = scmp.ne.s32.totalorder %s127, %s143
      %p145 = scmp.eq.s32.totalorder %s21, 0
      %p146 = por %p144, %p145
      %p147 = scmp.le.s32.totalorder 1, %s15
      %p148 = scmp.lt.s32.totalorder %s15, 3
      %p149 = pnand %p147, %p148
      %p150 = pneg %p149
      // Predicated region
      $region9: #{tpu_custom_call.1} parent=5 // pred_check
        _
      $region10: #{tpu_custom_call.1} parent=5 // pred_check_branch
        %152 = sbr.rel (%p149) target = $region12
      $region11: #{tpu_custom_call.1} parent=5 // pred_region
        %s153 = ssub.s32 %s15, 1
      $region12: #{tpu_custom_call.1} parent=5 // pred_fallthru
        _
      %p154 = scmp.lt.s32.totalorder %s15, 2
      // Predicated region
      $region13: #{tpu_custom_call.1} parent=5 // pred_check
        %p155 = pneg %p154
      $region14: #{tpu_custom_call.1} parent=5 // pred_check_branch
        %157 = sbr.rel (%p155) target = $region16
      $region15: #{tpu_custom_call.1} parent=5 // pred_region
        // Predicated region
        $region17: #{tpu_custom_call.1} parent=15 // pred_check
          %p158 = pneg %p49
        $region18: #{tpu_custom_call.1} parent=15 // pred_check_branch
          %160 = sbr.rel (%p158) target = $region20
        $region19: #{tpu_custom_call.1} parent=15 // pred_region
          %s161 = sand.u32 %s39, 1
          %s162 = scalar_lea.sflag [#allocation3], %s161
          %s163 = sand.u32 %s39, 1
          %s164 = smul.addr %s163, 8
          %s165 = scalar_lea.vmem [#allocation2], %s164
          %s167 = ssub.s32 128, 128
          %168 = vsyncadd %s162, %s167
          %s169 = sadd.s32 %s23, %s22
          %s170 = smul.addr %s169, 128
          %s171 = scalar_lea.hbm %s0, %s170
          %s173 = sshll.u32 %s165, 4
          %s174 = int_to_ptr.vmem [resolvable:$true] %s173
          %176 = dma.hbm_to_vmem [thread:$0]  %s171, 128, %s174, %s162
        $region20: #{tpu_custom_call.1} parent=15 // pred_fallthru
          _
        // Predicated region
        $region21: #{tpu_custom_call.1} parent=15 // pred_check
          %p177 = pneg %p77
        $region22: #{tpu_custom_call.1} parent=15 // pred_check_branch
          %179 = sbr.rel (%p177) target = $region24
        $region23: #{tpu_custom_call.1} parent=15 // pred_region
          %p180 = scmp.lt.s32.totalorder %s22, 1
          %s181 = scalar_select %p180, %s22, 1
          %p182 = scmp.lt.s32.totalorder %s23, 0
          %s183 = scalar_select %p182, %s23, 0
          %s184 = sadd.s32 %s183, %s181
          %s185 = smul.addr %s184, 8
          %s186 = scalar_lea.vmem %s1, %s185
        $region24: #{tpu_custom_call.1} parent=15 // pred_fallthru
          _
        // Predicated region
        $region25: #{tpu_custom_call.1} parent=15 // pred_check
          %p187 = pneg %p105
        $region26: #{tpu_custom_call.1} parent=15 // pred_check_branch
          %189 = sbr.rel (%p187) target = $region28
        $region27: #{tpu_custom_call.1} parent=15 // pred_region
          %p190 = scmp.lt.s32.totalorder %s22, 1
          %s191 = scalar_select %p190, %s22, 1
          %p192 = scmp.lt.s32.totalorder %s23, 0
          %s193 = scalar_select %p192, %s23, 0
          %s194 = sadd.s32 %s193, %s191
          %s195 = smul.addr %s194, 8
          %s196 = scalar_lea.vmem %s2, %s195
        $region28: #{tpu_custom_call.1} parent=15 // pred_fallthru
          _
      $region16: #{tpu_custom_call.1} parent=5 // pred_fallthru
        _
      %p197 = scmp.le.s32.totalorder 1, %s15
      %p198 = scmp.lt.s32.totalorder %s15, 3
      %p199 = pnand %p197, %p198
      %p200 = pneg %p199
      // Predicated region
      $region29: #{tpu_custom_call.1} parent=5 // pred_check
        _
      $region30: #{tpu_custom_call.1} parent=5 // pred_check_branch
        %202 = sbr.rel (%p199) target = $region32
      $region31: #{tpu_custom_call.1} parent=5 // pred_region
        %s203 = ssub.s32 %s15, 1
        %s204 = sand.u32 %s42, 1
        %s205 = scalar_lea.sflag [#allocation3], %s204
        %s206 = sand.u32 %s42, 1
        %s207 = smul.addr %s206, 8
        %s208 = scalar_lea.vmem [#allocation2], %s207
        // Predicated region
        $region33: #{tpu_custom_call.1} parent=31 // pred_check
          %p209 = pneg %p55
        $region34: #{tpu_custom_call.1} parent=31 // pred_check_branch
          %211 = sbr.rel (%p209) target = $region36
        $region35: #{tpu_custom_call.1} parent=31 // pred_region
          %212 = dma.done %s205, 128
        $region36: #{tpu_custom_call.1} parent=31 // pred_fallthru
          _
        %s213 = sand.u32 %s42, 1
        %s214 = scalar_lea.sflag [#allocation3], %s213
        %s215 = sand.u32 %s42, 1
        %s216 = smul.addr %s215, 8
        %s217 = scalar_lea.vmem [#allocation2], %s216
        %p218 = pneg %p55
        %p219 = pneg %p52
        %p220 = scmp.lt.s32.totalorder %s24, 1
        %s221 = scalar_select %p220, %s24, 1
        %p222 = scmp.lt.s32.totalorder %s25, 0
        %s223 = scalar_select %p222, %s25, 0
        %s224 = sadd.s32 %s223, %s221
        %s225 = smul.addr %s224, 8
        %s226 = scalar_lea.vmem %s1, %s225
        %p227 = pneg %p83
        %p228 = pneg %p80
        %p229 = scmp.lt.s32.totalorder %s24, 1
        %s230 = scalar_select %p229, %s24, 1
        %p231 = scmp.lt.s32.totalorder %s25, 0
        %s232 = scalar_select %p231, %s25, 0
        %s233 = sadd.s32 %s232, %s230
        %s234 = smul.addr %s233, 8
        %s235 = scalar_lea.vmem %s2, %s234
        %p236 = pneg %p111
        %p237 = pneg %p108
        %p238 = pneg %p139
        %p239 = pneg %p136
        %s240 = sand.u32 %s126, 1
        %s241 = scalar_lea.sflag [#allocation4], %s240
        %s242 = sand.u32 %s126, 1
        %s243 = smul.addr %s242, 8
        %s244 = scalar_lea.vmem [#allocation5], %s243
        %p245 = scmp.lt.s32.totalorder %s24, 1
        %s246 = scalar_select %p245, %s24, 1
        %p247 = scmp.lt.s32.totalorder %s25, 0
        %s248 = scalar_select %p247, %s25, 0
        %s249 = sadd.s32 %s248, %s246
        %s250 = smul.addr %s249, 8
        %s251 = scalar_lea.vmem %s1, %s250
        %p252 = scmp.lt.s32.totalorder %s24, 1
        %s253 = scalar_select %p252, %s24, 1
        %p254 = scmp.lt.s32.totalorder %s25, 0
        %s255 = scalar_select %p254, %s25, 0
        %s256 = sadd.s32 %s255, %s253
        %s257 = smul.addr %s256, 8
        %s258 = scalar_lea.vmem %s2, %s257
        %v259 = vld [vmem:[%s208] sm:$0xff]
        %v260 = vld [vmem:[%s251] sm:$0xff]
        %v261 = vld [vmem:[%s258] sm:$0xff]
        %263 = vset.pattern.permute.xlu0 0
        %264 = vperm.xlu0 %263, %v261
        %v265 = vpop.permute.xlu0 %264
        %v267 = vmul.f32 %v260, %v265
        %v268 = vadd.f32 %v259, %v267
        %vm269 = vcmask 261120
        %270 = vst.msk [vmem:[%s244] sm:$0xff] %vm269, %v268
        %s271 = sand.u32 %s126, 1
        %s272 = scalar_lea.sflag [#allocation4], %s271
        %s273 = sand.u32 %s126, 1
        %s274 = smul.addr %s273, 8
        %s275 = scalar_lea.vmem [#allocation5], %s274
        // Predicated region
        $region37: #{tpu_custom_call.1} parent=31 // pred_check
          %p276 = pneg %p136
        $region38: #{tpu_custom_call.1} parent=31 // pred_check_branch
          %278 = sbr.rel (%p276) target = $region40
        $region39: #{tpu_custom_call.1} parent=31 // pred_region
          %s280 = ssub.s32 128, 128
          %281 = vsyncadd %s272, %s280
          %s282 = sadd.s32 %s25, %s24
          %s283 = smul.addr %s282, 128
          %s284 = scalar_lea.hbm %s3, %s283
          %s286 = sshll.u32 %s275, 4
          %s287 = int_to_ptr.vmem [resolvable:$true] %s286
          %289 = dma.vmem_to_hbm [thread:$0]  %s287, 128, %s284, %s272
        $region40: #{tpu_custom_call.1} parent=31 // pred_fallthru
          _
      $region32: #{tpu_custom_call.1} parent=5 // pred_fallthru
        _
      %p290 = scmp.le.s32.totalorder 2, %s15
      // Predicated region
      $region41: #{tpu_custom_call.1} parent=5 // pred_check
        %p291 = pneg %p290
      $region42: #{tpu_custom_call.1} parent=5 // pred_check_branch
        %293 = sbr.rel (%p291) target = $region44
      $region43: #{tpu_custom_call.1} parent=5 // pred_region
        %s294 = ssub.s32 %s15, 2
        // Predicated region
        $region45: #{tpu_custom_call.1} parent=43 // pred_check
          %p295 = pneg %p142
        $region46: #{tpu_custom_call.1} parent=43 // pred_check_branch
          %297 = sbr.rel (%p295) target = $region48
        $region47: #{tpu_custom_call.1} parent=43 // pred_region
          %s298 = sand.u32 %s127, 1
          %s299 = scalar_lea.sflag [#allocation4], %s298
          %s300 = sand.u32 %s127, 1
          %s301 = smul.addr %s300, 8
          %s302 = scalar_lea.vmem [#allocation5], %s301
          %303 = dma.done %s299, 128
        $region48: #{tpu_custom_call.1} parent=43 // pred_fallthru
          _
      $region44: #{tpu_custom_call.1} parent=5 // pred_fallthru
        _
    $region6: #{tpu_custom_call.1} parent=1 // loop_footer
      %s19 = sadd.s32 1, %s15
    $region7: #{tpu_custom_call.1} parent=1 // loop_footer_branch
      %14 = sbr.rel target = $region3
    $region8: #{tpu_custom_call.1} parent=1 // loop_exit
      _
    %304 = vsyncpa [#allocation3], 1
    %s305 = scalar_lea.sflag [#allocation3], 1
    %306 = vsyncpa %s305, 1
    %307 = vsyncpa [#allocation4], 1
    %s308 = scalar_lea.sflag [#allocation4], 1
    %309 = vsyncpa %s308, 1

</llo_original>
